<compile_context>
chip_gen: v7x
topology: tpu7x:2x2x1
jax: 0.10.0
libtpu: 0.0.40
codegen_flags: <defaults>
</compile_context>

<pallas_src>
import functools

import jax
import jax.numpy as jnp
from jax import lax
from jax.experimental import pallas as pl
from jax.experimental.pallas import tpu as pltpu


# --------------------------------------------------------------------------
# Kernel 1: GroupNorm statistics (per-channel sum / sumsq, accumulated over N)
# --------------------------------------------------------------------------
def _gn_stats_kernel(x_ref, sum_ref, sq_ref):
    """x_ref: (1, C, tn) f32 channel-first tile.  Outputs (1, C, 1) resident
    accumulators (same block for every n step of the 'arbitrary' axis)."""
    n = pl.program_id(1)

    @pl.when(n == 0)
    def _():
        sum_ref[0] = jnp.zeros(sum_ref.shape[1:], jnp.float32)
        sq_ref[0] = jnp.zeros(sq_ref.shape[1:], jnp.float32)

    x = x_ref[0]                                           # (C, tn) f32
    sum_ref[0] += jnp.sum(x, axis=-1, keepdims=True)       # lane reduce (XLU)
    sq_ref[0] += jnp.sum(x * x, axis=-1, keepdims=True)


# --------------------------------------------------------------------------
# Kernel 2: affine normalize + fused Q/K/V projection
# --------------------------------------------------------------------------
def _norm_qkv_kernel(x_ref, scale_ref, shift_ref, wqkv_ref, bqkv_ref,
                     q_ref, k_ref, v_ref, *, cp):
    """x_ref: (1, C, tn) f32 channel-first.  scale/shift: (1, C, 1) f32 with
    gamma/beta and rsqrt(var+eps) already folded.  wqkv: (C, 3*Cp) bf16 with
    the softmax scale folded into the Wq columns.  Outputs channel-last bf16
    (1, tn, Cp) tiles (lane-dense stores)."""
    x = x_ref[0]                                           # (C, tn) f32
    h = x * scale_ref[0] + shift_ref[0]                    # GroupNorm affine
    # layout flip on the XLU (overlaps with the MXU matmul below)
    h_cl = jnp.transpose(h).astype(jnp.bfloat16)           # (tn, C) bf16

    qkv = jnp.dot(h_cl, wqkv_ref[...],
                  preferred_element_type=jnp.float32) + bqkv_ref[...]
    qkv = qkv.astype(jnp.bfloat16)                         # (tn, 3*Cp)

    q_ref[0] = qkv[:, :cp]
    k_ref[0] = qkv[:, cp:2 * cp]
    v_ref[0] = qkv[:, 2 * cp:]


# --------------------------------------------------------------------------
# Kernel 3: flash attention + output projection + residual (channel-first out)
# --------------------------------------------------------------------------
def _flash_attn_kernel(x_ref, q_ref, k_ref, v_ref, wpT_ref, bp_ref, out_ref,
                       m_scr, l_scr, acc_scr, *, tkv, resident):
    """grid = (B, N//tq, N//tkv); kv axis last and 'arbitrary'.
    resident=True: k_ref / v_ref hold the whole (1, N, Cp) batch element in
    VMEM (fetched once per batch) and are sliced here with pl.ds.
    Softmax scale is already folded into q.  Normalization is deferred past
    p@v; the projection is emitted channel-first so no output transpose."""
    kv = pl.program_id(2)

    @pl.when(kv == 0)
    def _():
        m_scr[...] = jnp.full(m_scr.shape, -jnp.inf, jnp.float32)
        l_scr[...] = jnp.zeros(l_scr.shape, jnp.float32)
        acc_scr[...] = jnp.zeros(acc_scr.shape, jnp.float32)

    q = q_ref[0]                                           # (tq, Cp) bf16
    if resident:
        start = pl.multiple_of(kv * tkv, tkv)
        k = k_ref[0, pl.ds(start, tkv), :]                 # (tkv, Cp) bf16
        v = v_ref[0, pl.ds(start, tkv), :]
    else:
        k = k_ref[0]
        v = v_ref[0]

    # q @ k^T: contract the channel (last) dims — standard flash orientation.
    s = lax.dot_general(q, k, (((1,), (1,)), ((), ())),
                        preferred_element_type=jnp.float32)    # (tq, tkv) f32

    m_prev = m_scr[...]
    m_new = jnp.maximum(m_prev, jnp.max(s, axis=-1, keepdims=True))
    alpha = jnp.exp(m_prev - m_new)
    p = jnp.exp(s - m_new)                                 # unnormalized probs
    l_scr[...] = alpha * l_scr[...] + jnp.sum(p, axis=-1, keepdims=True)
    acc_scr[...] = alpha * acc_scr[...] + jnp.dot(
        p.astype(jnp.bfloat16), v, preferred_element_type=jnp.float32)
    m_scr[...] = m_new

    @pl.when(kv == pl.num_programs(2) - 1)
    def _():
        # deferred normalization (EUP approx reciprocal), then channel-first
        # projection: (C, Cp) x (tq, Cp) contracted on the last dims -> (C, tq)
        o = (acc_scr[...] * pl.reciprocal(l_scr[...], approx=True)
             ).astype(jnp.bfloat16)
        proj = lax.dot_general(wpT_ref[...], o, (((1,), (1,)), ((), ())),
                               preferred_element_type=jnp.float32)  # (C, tq)
        out_ref[0] = x_ref[0] + proj + bp_ref[...]


# --------------------------------------------------------------------------
# Helpers
# --------------------------------------------------------------------------
def _pick_tile(n, pref):
    """Largest multiple of 128 that divides n and is <= pref, else n (full)."""
    best = None
    t = 128
    while t <= min(pref, n):
        if n % t == 0:
            best = t
        t += 128
    return best if best is not None else n


def _vmem_limit_bytes():
    """Generation-aware VMEM limit with headroom for Mosaic internal scratch."""
    default = 64 * 1024 * 1024
    try:
        cap = int(pltpu.get_tpu_info().vmem_capacity_bytes)
    except Exception:
        return default
    return max(32 * 1024 * 1024, min((cap * 3) // 4, 112 * 1024 * 1024))


# --------------------------------------------------------------------------
# Wrapper
# --------------------------------------------------------------------------
def attn_block_pallas(x, params, *, num_groups=32, eps=1e-6,
                      q_tile=256, kv_tile=1024, norm_tile=256):
    """x: (B, C, H, W, D) float32.  Returns same shape."""
    B, C, H, W, D = x.shape
    N = H * W * D
    assert C % num_groups == 0
    cg = C // num_groups
    G = num_groups

    LANE = 128
    Cp = ((C + LANE - 1) // LANE) * LANE     # lane-dense width for q/k/v only
    pc = Cp - C

    tn = _pick_tile(N, norm_tile)
    tq = _pick_tile(N, q_tile)
    tkv = _pick_tile(N, kv_tile)
    vmem_limit = _vmem_limit_bytes()

    f32, bf16 = jnp.float32, jnp.bfloat16
    x_cf = x.reshape(B, C, N).astype(f32)     # channel-first, free reshape

    # ---- parameters: fused QKV weight, transposed proj weight ----
    def _w(name):
        return params[name].astype(f32).reshape(C, C)     # (C_in, C_out)

    def _b(name):
        return params[name].astype(f32).reshape(-1)        # (C,)

    scale = float(C) ** (-0.5)
    wqkv = jnp.concatenate([
        jnp.pad(_w("wq") * scale, ((0, 0), (0, pc))),
        jnp.pad(_w("wk"), ((0, 0), (0, pc))),
        jnp.pad(_w("wv"), ((0, 0), (0, pc))),
    ], axis=1).astype(bf16)                                 # (C, 3*Cp)
    bqkv = jnp.concatenate([
        jnp.pad(_b("bq") * scale, (0, pc)),
        jnp.pad(_b("bk"), (0, pc)),
        jnp.pad(_b("bv"), (0, pc)),
    ])[None, :]                                             # (1, 3*Cp) f32
    wpT = jnp.pad(_w("wp").T, ((0, 0), (0, pc))).astype(bf16)   # (C, Cp)
    bp = _b("bp").reshape(C, 1)                             # (C, 1) f32

    # ---------------- kernel 1: GroupNorm statistics ----------------
    nt = N // tn
    stats_sum, stats_sq = pl.pallas_call(
        _gn_stats_kernel,
        out_shape=(jax.ShapeDtypeStruct((B, C, 1), f32),
                   jax.ShapeDtypeStruct((B, C, 1), f32)),
        grid_spec=pltpu.PrefetchScalarGridSpec(
            num_scalar_prefetch=0,
            grid=(B, nt),
            in_specs=[pl.BlockSpec((1, C, tn), lambda b, n: (b, 0, n))],
            out_specs=(pl.BlockSpec((1, C, 1), lambda b, n: (b, 0, 0)),
                       pl.BlockSpec((1, C, 1), lambda b, n: (b, 0, 0))),
        ),
        compiler_params=pltpu.CompilerParams(
            dimension_semantics=("parallel", "arbitrary"),
            vmem_limit_bytes=vmem_limit),
    )(x_cf)

    # tiny (B, C) group reduce + affine fold in plain JAX (negligible work)
    cnt = float(N * cg)
    g_sum = stats_sum[..., 0].reshape(B, G, cg).sum(-1)     # (B, G)
    g_sq = stats_sq[..., 0].reshape(B, G, cg).sum(-1)
    mean = g_sum / cnt
    var = jnp.maximum(g_sq / cnt - mean * mean, 0.0)
    rstd = lax.rsqrt(var + eps)
    mean_c = jnp.repeat(mean, cg, axis=1)                   # (B, C)
    rstd_c = jnp.repeat(rstd, cg, axis=1)
    scale_c = _b("gamma")[None, :] * rstd_c
    shift_c = _b("beta")[None, :] - mean_c * scale_c
    scale_in = scale_c[:, :, None].astype(f32)              # (B, C, 1)
    shift_in = shift_c[:, :, None].astype(f32)

    # ---------------- kernel 2: normalize + fused QKV ----------------
    full2 = lambda a: pl.BlockSpec(a.shape, lambda b, n: (0, 0))
    qkv_shape = jax.ShapeDtypeStruct((B, N, Cp), bf16)
    q, k, v = pl.pallas_call(
        functools.partial(_norm_qkv_kernel, cp=Cp),
        out_shape=(qkv_shape, qkv_shape, qkv_shape),
        grid_spec=pltpu.PrefetchScalarGridSpec(
            num_scalar_prefetch=0,
            grid=(B, nt),
            in_specs=[
                pl.BlockSpec((1, C, tn), lambda b, n: (b, 0, n)),
                pl.BlockSpec((1, C, 1), lambda b, n: (b, 0, 0)),
                pl.BlockSpec((1, C, 1), lambda b, n: (b, 0, 0)),
                full2(wqkv), full2(bqkv),
            ],
            out_specs=(pl.BlockSpec((1, tn, Cp), lambda b, n: (b, n, 0)),) * 3,
        ),
        compiler_params=pltpu.CompilerParams(
            dimension_semantics=("parallel", "parallel"),
            vmem_limit_bytes=vmem_limit),
    )(x_cf, scale_in, shift_in, wqkv, bqkv)

    # ---------------- kernel 3: flash attention + proj + residual --------
    # Resident K/V (fetched once per batch) whenever it comfortably fits VMEM;
    # otherwise fall back to streaming kv tiles.
    kv_bytes_resident = 2 * 2 * N * Cp * 2       # k+v, double-buffered, bf16
    kv_resident = kv_bytes_resident <= (vmem_limit // 2)
    if kv_resident:
        kv_spec = pl.BlockSpec((1, N, Cp), lambda b, qi, ki: (b, 0, 0))
    else:
        kv_spec = pl.BlockSpec((1, tkv, Cp), lambda b, qi, ki: (b, ki, 0))
    full3 = lambda a: pl.BlockSpec(a.shape, lambda b, qi, ki: (0, 0))

    out_cf = pl.pallas_call(
        functools.partial(_flash_attn_kernel, tkv=tkv, resident=kv_resident),
        out_shape=jax.ShapeDtypeStruct((B, C, N), f32),
        grid_spec=pltpu.PrefetchScalarGridSpec(
            num_scalar_prefetch=0,
            grid=(B, N // tq, N // tkv),
            in_specs=[
                pl.BlockSpec((1, C, tq), lambda b, qi, ki: (b, 0, qi)),   # x
                pl.BlockSpec((1, tq, Cp), lambda b, qi, ki: (b, qi, 0)),  # q
                kv_spec,                                                  # k
                kv_spec,                                                  # v
                full3(wpT), full3(bp),
            ],
            out_specs=pl.BlockSpec((1, C, tq), lambda b, qi, ki: (b, 0, qi)),
            scratch_shapes=[pltpu.VMEM((tq, 1), f32),
                            pltpu.VMEM((tq, 1), f32),
                            pltpu.VMEM((tq, Cp), f32)],
        ),
        compiler_params=pltpu.CompilerParams(
            dimension_semantics=("parallel", "parallel", "arbitrary"),
            vmem_limit_bytes=vmem_limit),
    )(x_cf, q, k, v, wpT, bp)

    return out_cf.reshape(B, C, H, W, D)     # free reshape, already (B, C, N)


# --------------------------------------------------------------------------
# Synthetic parameters + pure-JAX reference (f32) for validation
# --------------------------------------------------------------------------
def make_params(key, C):
    """Deterministic synthetic parameters matching AttnBlock.__init__ shapes.
    Conv3d(C, C, 1) weights are stored as (C_in, C_out); biases as (C,)."""
    ks = jax.random.split(key, 10)

    def conv_w(k):
        return jax.random.normal(k, (C, C), jnp.float32) * 0.05

    def conv_b(k):
        return jax.random.normal(k, (C,), jnp.float32) * 0.05

    return dict(
        gamma=jax.random.normal(ks[0], (C,), jnp.float32) * 0.1 + 1.0,
        beta=jax.random.normal(ks[1], (C,), jnp.float32) * 0.1,
        wq=conv_w(ks[2]), bq=conv_b(ks[3]),
        wk=conv_w(ks[4]), bk=conv_b(ks[5]),
        wv=conv_w(ks[6]), bv=conv_b(ks[7]),
        wp=conv_w(ks[8]), bp=conv_b(ks[9]),
    )


def attn_block_reference(x, params, *, num_groups, eps=1e-6):
    """Pure-JAX f32 reference mirroring the PyTorch AttnBlock forward."""
    B, C, H, W, D = x.shape
    N = H * W * D
    cg = C // num_groups
    xr = x.reshape(B, num_groups, cg, N)
    mean = xr.mean(axis=(2, 3), keepdims=True)
    var = ((xr - mean) ** 2).mean(axis=(2, 3), keepdims=True)
    hn = ((xr - mean) / jnp.sqrt(var + eps)).reshape(B, C, N)
    hn = hn * params["gamma"].reshape(1, C, 1) + params["beta"].reshape(1, C, 1)
    hcl = jnp.transpose(hn, (0, 2, 1))                     # (B, N, C)
    q = hcl @ params["wq"] + params["bq"][None, None, :]
    k = hcl @ params["wk"] + params["bk"][None, None, :]
    v = hcl @ params["wv"] + params["bv"][None, None, :]
    logits = jnp.einsum("bic,bjc->bij", q, k) * (float(C) ** -0.5)
    attn = jax.nn.softmax(logits, axis=2)
    o = jnp.einsum("bij,bjc->bic", attn, v)
    proj = o @ params["wp"] + params["bp"][None, None, :]
    out = jnp.transpose(x.reshape(B, C, N), (0, 2, 1)) + proj
    return jnp.transpose(out, (0, 2, 1)).reshape(B, C, H, W, D)


if __name__ == "__main__":
    # N = 512 positions and small tiles so the multi-kv-tile online-softmax
    # carry, multi-q-tile, multi-N-tile GroupNorm accumulation, the resident
    # K/V pl.ds slicing and the cg>1 group reduce are all exercised.
    B, C, H, W, D = 2, 64, 8, 8, 8
    num_groups = 32                          # AttnBlock / Normalize default
    key = jax.random.PRNGKey(0)
    kx, kp = jax.random.split(key)
    x = jax.random.normal(kx, (B, C, H, W, D), jnp.float32)
    params = make_params(kp, C)

    out = attn_block_pallas(x, params, num_groups=num_groups,
                            q_tile=128, kv_tile=128, norm_tile=128)
    out = jax.block_until_ready(out)

    ref = attn_block_reference(x, params, num_groups=num_groups)
    assert out.shape == (B, C, H, W, D)
    # bf16 MXU operands + approx reciprocal -> loosened tolerance vs f32 ref
    max_err = float(jnp.max(jnp.abs(out - ref)))
    assert jnp.allclose(out, ref, atol=2e-2, rtol=2e-2), \
        f"mismatch vs reference (max abs err {max_err})"

    print("KERNEL_OK")
</pallas_src>

<mosaic_0001>
module attributes {stable_mosaic.version = 11 : i64} {
  func.func @_gn_stats_kernel(%arg0: i32, %arg1: i32, %arg2: memref<1x64x128xf32, #tpu.memory_space<vmem>>, %arg3: memref<1x64x1xf32, #tpu.memory_space<vmem>>, %arg4: memref<1x64x1xf32, #tpu.memory_space<vmem>>) attributes {dimension_semantics = [#tpu.dimension_semantics<parallel>, #tpu.dimension_semantics<arbitrary>], iteration_bounds = array<i64: 2, 4>, scalar_prefetch = 0 : i64, scratch_operands = 0 : i64, tpu.core_type = #tpu.core_type<tc>, window_params = [{transform_indices = @transform_0, window_bounds = array<i64: 1, 64, 128>}, {transform_indices = @transform_1, window_bounds = array<i64: 1, 64, 1>}, {transform_indices = @transform_2, window_bounds = array<i64: 1, 64, 1>}]} {
    %c0_i32 = arith.constant 0 : i32
    %0 = arith.cmpi eq, %arg1, %c0_i32 : i32
    %1 = arith.extui %0 : i1 to i32
    %c0_i32_0 = arith.constant 0 : i32
    %2 = arith.cmpi ne, %1, %c0_i32_0 : i32
    scf.if %2 {
      %cst_16 = arith.constant 0.000000e+00 : f32
      %22 = vector.broadcast %cst_16 : f32 to vector<64x1xf32>
      %c0_17 = arith.constant 0 : index
      %c0_18 = arith.constant 0 : index
      %c0_19 = arith.constant 0 : index
      %23 = vector.load %arg3[%c0_17, %c0_18, %c0_19] : memref<1x64x1xf32, #tpu.memory_space<vmem>>, vector<1x64x1xf32>
      %24 = vector.shape_cast %23 : vector<1x64x1xf32> to vector<64x1xf32>
      %25 = vector.shape_cast %22 : vector<64x1xf32> to vector<1x64x1xf32>
      tpu.vector_store %arg3[%c0_17, %c0_18, %c0_19], %25 {strides = array<i32>} : memref<1x64x1xf32, #tpu.memory_space<vmem>>, vector<1x64x1xf32>,
      %cst_20 = arith.constant 0.000000e+00 : f32
      %26 = vector.broadcast %cst_20 : f32 to vector<64x1xf32>
      %c0_21 = arith.constant 0 : index
      %c0_22 = arith.constant 0 : index
      %c0_23 = arith.constant 0 : index
      %27 = vector.load %arg4[%c0_21, %c0_22, %c0_23] : memref<1x64x1xf32, #tpu.memory_space<vmem>>, vector<1x64x1xf32>
      %28 = vector.shape_cast %27 : vector<1x64x1xf32> to vector<64x1xf32>
      %29 = vector.shape_cast %26 : vector<64x1xf32> to vector<1x64x1xf32>
      tpu.vector_store %arg4[%c0_21, %c0_22, %c0_23], %29 {strides = array<i32>} : memref<1x64x1xf32, #tpu.memory_space<vmem>>, vector<1x64x1xf32>,
    } else {
    }
    %c0 = arith.constant 0 : index
    %c0_1 = arith.constant 0 : index
    %c0_2 = arith.constant 0 : index
    %3 = vector.load %arg2[%c0, %c0_1, %c0_2] : memref<1x64x128xf32, #tpu.memory_space<vmem>>, vector<1x64x128xf32>
    %4 = vector.shape_cast %3 : vector<1x64x128xf32> to vector<64x128xf32>
    %c0_3 = arith.constant 0 : index
    %c0_4 = arith.constant 0 : index
    %c0_5 = arith.constant 0 : index
    %5 = vector.load %arg3[%c0_3, %c0_4, %c0_5] : memref<1x64x1xf32, #tpu.memory_space<vmem>>, vector<1x64x1xf32>
    %6 = vector.shape_cast %5 : vector<1x64x1xf32> to vector<64x1xf32>
    %cst = arith.constant dense<0.000000e+00> : vector<64xf32>
    %7 = vector.multi_reduction <add>, %4, %cst [1] : vector<64x128xf32> to vector<64xf32>
    %8 = vector.shape_cast %7 : vector<64xf32> to vector<64x1xf32>
    %9 = arith.addf %6, %8 : vector<64x1xf32>
    %c0_6 = arith.constant 0 : index
    %c0_7 = arith.constant 0 : index
    %c0_8 = arith.constant 0 : index
    %10 = vector.load %arg3[%c0_6, %c0_7, %c0_8] : memref<1x64x1xf32, #tpu.memory_space<vmem>>, vector<1x64x1xf32>
    %11 = vector.shape_cast %10 : vector<1x64x1xf32> to vector<64x1xf32>
    %12 = vector.shape_cast %9 : vector<64x1xf32> to vector<1x64x1xf32>
    tpu.vector_store %arg3[%c0_6, %c0_7, %c0_8], %12 {strides = array<i32>} : memref<1x64x1xf32, #tpu.memory_space<vmem>>, vector<1x64x1xf32>,
    %c0_9 = arith.constant 0 : index
    %c0_10 = arith.constant 0 : index
    %c0_11 = arith.constant 0 : index
    %13 = vector.load %arg4[%c0_9, %c0_10, %c0_11] : memref<1x64x1xf32, #tpu.memory_space<vmem>>, vector<1x64x1xf32>
    %14 = vector.shape_cast %13 : vector<1x64x1xf32> to vector<64x1xf32>
    %15 = arith.mulf %4, %4 : vector<64x128xf32>
    %cst_12 = arith.constant dense<0.000000e+00> : vector<64xf32>
    %16 = vector.multi_reduction <add>, %15, %cst_12 [1] : vector<64x128xf32> to vector<64xf32>
    %17 = vector.shape_cast %16 : vector<64xf32> to vector<64x1xf32>
    %18 = arith.addf %14, %17 : vector<64x1xf32>
    %c0_13 = arith.constant 0 : index
    %c0_14 = arith.constant 0 : index
    %c0_15 = arith.constant 0 : index
    %19 = vector.load %arg4[%c0_13, %c0_14, %c0_15] : memref<1x64x1xf32, #tpu.memory_space<vmem>>, vector<1x64x1xf32>
    %20 = vector.shape_cast %19 : vector<1x64x1xf32> to vector<64x1xf32>
    %21 = vector.shape_cast %18 : vector<64x1xf32> to vector<1x64x1xf32>
    tpu.vector_store %arg4[%c0_13, %c0_14, %c0_15], %21 {strides = array<i32>} : memref<1x64x1xf32, #tpu.memory_space<vmem>>, vector<1x64x1xf32>,
    return
  }
  func.func @transform_0(%arg0: i32, %arg1: i32) -> (i32, i32, i32) {
    %c0_i32 = arith.constant 0 : i32
    %c0_i32_0 = arith.constant 0 : i32
    return %arg0, %c0_i32, %arg1 : i32, i32, i32
  }
  func.func @transform_1(%arg0: i32, %arg1: i32) -> (i32, i32, i32) {
    %c0_i32 = arith.constant 0 : i32
    %c0_i32_0 = arith.constant 0 : i32
    %c0_i32_1 = arith.constant 0 : i32
    return %arg0, %c0_i32, %c0_i32_0 : i32, i32, i32
  }
  func.func @transform_2(%arg0: i32, %arg1: i32) -> (i32, i32, i32) {
    %c0_i32 = arith.constant 0 : i32
    %c0_i32_0 = arith.constant 0 : i32
    %c0_i32_1 = arith.constant 0 : i32
    return %arg0, %c0_i32, %c0_i32_0 : i32, i32, i32
  }
}

</mosaic_0001>

<llo_original>
// kernel: tpu_custom_call.1
$region0: #{tpu_custom_call.1}
  #allocation0 [shape = 'u32[]', space=smem, size = 0x4, offset = 0x4, fixed_abs, tag = 'smem constant byte address 0x4 - core index']
  #allocation1 [shape = 'u32[144,128]{1,0:T(1,128)}', space=vmem, size = 0x12000, scoped, tag = 'internal scratch']
  %s0 = inlined_call_operand.hbm [shape: f32[2,64,512], index: 0, kind: input, shape index: {}]
  %s1 = inlined_call_operand.hbm [shape: f32[2,64,1], index: 1, kind: output, shape index: {0}]
  %s2 = inlined_call_operand.hbm [shape: f32[2,64,1], index: 2, kind: output, shape index: {1}]
  %3 = xla_tuple %s1, %s2
  %s4 = sld [smem:[#allocation0]]
  $region53: #{tpu_custom_call.1} parent=0
    _
  %s6 = ssub.s32 1, %s4
  %s7 = scalar_select 0, %s6, %s4
  $region1: #{tpu_custom_call.1} parent=0
    #allocation2 [shape = 'u8[65536]{0}', space=vmem, size = 0x10000, scoped, tag = 'input window, operand 0']
    #allocation3 [shape = 's32[2]{0}', space=sflag, size = 0x8, scoped, tag = 'scoped memory for tpu_custom_call.1']
    #allocation4 [shape = 's32[2]{0}', space=sflag, size = 0x8, scoped, tag = 'scoped memory for tpu_custom_call.1']
    #allocation5 [shape = 'u8[65536]{0}', space=vmem, size = 0x10000, scoped, tag = 'output window, operand 0']
    #allocation6 [shape = 'u8[65536]{0}', space=vmem, size = 0x10000, scoped, tag = 'output window, operand 1']
    #allocation7 [shape = 's32[2]{0}', space=sflag, size = 0x8, scoped, tag = 'scoped memory for tpu_custom_call.1']
    %8 = vsyncpa [#allocation3], 0
    %s9 = scalar_lea.sflag [#allocation3], 1
    %10 = vsyncpa %s9, 0
    %11 = vsyncpa [#allocation4], 0
    %s12 = scalar_lea.sflag [#allocation4], 1
    %13 = vsyncpa %s12, 0
    %14 = vsyncpa [#allocation7], 0
    %s15 = scalar_lea.sflag [#allocation7], 1
    %16 = vsyncpa %s15, 0
    loop: start=0, step=1, limit=10
    $region2: #{tpu_custom_call.1} parent=1 // loop_pre_header
      _
    $region3: #{tpu_custom_call.1} parent=1 // loop_header
      %s18 = sphi 0, %s22
      %p19 = scmp.ge.s32.totalorder %s18, 10
      %s25 = sphi 0, %s37
      %s26 = sphi 0, %s33
      %s27 = sphi 0, %s25
      %s28 = sphi 0, %s26
      %s29 = sphi 0, %s27
      %s30 = sphi 0, %s28
      %s42 = sphi 0, %s44
      %s45 = sphi 0, %s42
      %s46 = sphi 0, %s45
      %s62 = sphi 0, %s46
      %s68 = sphi 0, %s70
      %s71 = sphi 0, %s68
      %s72 = sphi 0, %s71
      %s88 = sphi 0, %s72
      %s94 = sphi 0, %s96
      %s97 = sphi 0, %s94
      %s98 = sphi 0, %s97
      %s114 = sphi 0, %s98
    $region4: #{tpu_custom_call.1} parent=1 // loop_header_branch
      %21 = sbr.rel (%p19) target = $region8
    $region5: #{tpu_custom_call.1} parent=1 // loop_body
      %s23 = ssub.s32 %s18, 1
      %s24 = ssub.s32 %s18, 2
      %s31 = sadd.s32 1, %s26
      %p32 = scmp.ge.s32.totalorder %s31, 4
      %s33 = scalar_select %p32, 0, %s31
      %s34 = sadd.s32 1, %s25
      %s35 = scalar_select %p32, %s34, %s25
      %p36 = scmp.ge.s32.totalorder %s35, 2
      %s37 = scalar_select %p36, 0, %s35
      %s38 = ssub.s32 %s25, %s37
      %s39 = ssub.s32 %s26, %s33
      %s40 = sor.u32 %s38, %s39
      %p41 = scmp.eq.s32.totalorder %s40, 0
      %s43 = sadd.s32 %s42, 1
      %s44 = scalar_select %p41, %s42, %s43
      %p47 = pneg %p41
      %p48 = scmp.eq.s32.totalorder %s18, 7
      %p49 = por %p47, %p48
      %p50 = scmp.ne.s32.totalorder %s42, %s45
      %p51 = scmp.eq.s32.totalorder %s18, 0
      %p52 = por %p50, %p51
      %p53 = scmp.ne.s32.totalorder %s42, %s45
      %p54 = scmp.eq.s32.totalorder %s23, 7
      %p55 = por %p53, %p54
      %p56 = scmp.ne.s32.totalorder %s45, %s46
      %p57 = scmp.eq.s32.totalorder %s23, 0
      %p58 = por %p56, %p57
      %p59 = scmp.ne.s32.totalorder %s45, %s46
      %p60 = scmp.eq.s32.totalorder %s24, 7
      %p61 = por %p59, %p60
      %p63 = scmp.ne.s32.totalorder %s46, %s62
      %p64 = scmp.eq.s32.totalorder %s24, 0
      %p65 = por %p63, %p64
      %s66 = ssub.s32 %s25, %s37
      %p67 = scmp.eq.s32.totalorder %s66, 0
      %s69 = sadd.s32 %s68, 1
      %s70 = scalar_select %p67, %s68, %s69
      %p73 = pneg %p67
      %p74 = scmp.eq.s32.totalorder %s18, 7
      %p75 = por %p73, %p74
      %p76 = scmp.ne.s32.totalorder %s68, %s71
      %p77 = scmp.eq.s32.totalorder %s18, 0
      %p78 = por %p76, %p77
      %p79 = scmp.ne.s32.totalorder %s68, %s71
      %p80 = scmp.eq.s32.totalorder %s23, 7
      %p81 = por %p79, %p80
      %p82 = scmp.ne.s32.totalorder %s71, %s72
      %p83 = scmp.eq.s32.totalorder %s23, 0
      %p84 = por %p82, %p83
      %p85 = scmp.ne.s32.totalorder %s71, %s72
      %p86 = scmp.eq.s32.totalorder %s24, 7
      %p87 = por %p85, %p86
      %p89 = scmp.ne.s32.totalorder %s72, %s88
      %p90 = scmp.eq.s32.totalorder %s24, 0
      %p91 = por %p89, %p90
      %s92 = ssub.s32 %s25, %s37
      %p93 = scmp.eq.s32.totalorder %s92, 0
      %s95 = sadd.s32 %s94, 1
      %s96 = scalar_select %p93, %s94, %s95
      %p99 = pneg %p93
      %p100 = scmp.eq.s32.totalorder %s18, 7
      %p101 = por %p99, %p100
      %p102 = scmp.ne.s32.totalorder %s94, %s97
      %p103 = scmp.eq.s32.totalorder %s18, 0
      %p104 = por %p102, %p103
      %p105 = scmp.ne.s32.totalorder %s94, %s97
      %p106 = scmp.eq.s32.totalorder %s23, 7
      %p107 = por %p105, %p106
      %p108 = scmp.ne.s32.totalorder %s97, %s98
      %p109 = scmp.eq.s32.totalorder %s23, 0
      %p110 = por %p108, %p109
      %p111 = scmp.ne.s32.totalorder %s97, %s98
      %p112 = scmp.eq.s32.totalorder %s24, 7
      %p113 = por %p111, %p112
      %p115 = scmp.ne.s32.totalorder %s98, %s114
      %p116 = scmp.eq.s32.totalorder %s24, 0
      %p117 = por %p115, %p116
      %p118 = scmp.le.s32.totalorder 1, %s18
      %p119 = scmp.lt.s32.totalorder %s18, 9
      %p120 = pnand %p118, %p119
      %p121 = pneg %p120
      // Predicated region
      $region9: #{tpu_custom_call.1} parent=5 // pred_check
        _
      $region10: #{tpu_custom_call.1} parent=5 // pred_check_branch
        %123 = sbr.rel (%p120) target = $region12
      $region11: #{tpu_custom_call.1} parent=5 // pred_region
        %s124 = ssub.s32 %s18, 1
      $region12: #{tpu_custom_call.1} parent=5 // pred_fallthru
        _
      %p125 = scmp.lt.s32.totalorder %s18, 8
      // Predicated region
      $region13: #{tpu_custom_call.1} parent=5 // pred_check
        %p126 = pneg %p125
      $region14: #{tpu_custom_call.1} parent=5 // pred_check_branch
        %128 = sbr.rel (%p126) target = $region16
      $region15: #{tpu_custom_call.1} parent=5 // pred_region
        // Predicated region
        $region17: #{tpu_custom_call.1} parent=15 // pred_check
          %p129 = pneg %p52
        $region18: #{tpu_custom_call.1} parent=15 // pred_check_branch
          %131 = sbr.rel (%p129) target = $region20
        $region19: #{tpu_custom_call.1} parent=15 // pred_region
          %s132 = sand.u32 %s42, 1
          %s133 = scalar_lea.sflag [#allocation3], %s132
          %s134 = sand.u32 %s42, 1
          %s135 = smul.addr %s134, 64
          %s136 = scalar_lea.vmem [#allocation2], %s135
          %s138 = ssub.s32 1024, 1024
          %139 = vsyncadd %s133, %s138
          %s140 = smul.addr %s25, 32
          %s141 = sadd.s32 %s26, %s140
          %s142 = smul.addr %s141, 128
          %s143 = scalar_lea.hbm %s0, %s142
          %s144 = sshll.u32 %s136, 4
          %s145 = int_to_ptr.vmem [resolvable:$true] %s144
          %150 = dma.hbm_to_vmem [thread:$0]  %s143, 1024, %s145, %s133, 512, 128, 8
        $region20: #{tpu_custom_call.1} parent=15 // pred_fallthru
          _
      $region16: #{tpu_custom_call.1} parent=5 // pred_fallthru
        _
      %p151 = scmp.le.s32.totalorder 1, %s18
      %p152 = scmp.lt.s32.totalorder %s18, 9
      %p153 = pnand %p151, %p152
      %p154 = pneg %p153
      // Predicated region
      $region21: #{tpu_custom_call.1} parent=5 // pred_check
        _
      $region22: #{tpu_custom_call.1} parent=5 // pred_check_branch
        %156 = sbr.rel (%p153) target = $region24
      $region23: #{tpu_custom_call.1} parent=5 // pred_region
        %s157 = ssub.s32 %s18, 1
        %s158 = sand.u32 %s45, 1
        %s159 = scalar_lea.sflag [#allocation3], %s158
        %s160 = sand.u32 %s45, 1
        %s161 = smul.addr %s160, 64
        %s162 = scalar_lea.vmem [#allocation2], %s161
        // Predicated region
        $region25: #{tpu_custom_call.1} parent=23 // pred_check
          %p163 = pneg %p58
        $region26: #{tpu_custom_call.1} parent=23 // pred_check_branch
          %165 = sbr.rel (%p163) target = $region28
        $region27: #{tpu_custom_call.1} parent=23 // pred_region
          %166 = dma.done %s159, 1024
        $region28: #{tpu_custom_call.1} parent=23 // pred_fallthru
          _
        %s167 = sand.u32 %s45, 1
        %s168 = scalar_lea.sflag [#allocation3], %s167
        %s169 = sand.u32 %s45, 1
        %s170 = smul.addr %s169, 64
        %s171 = scalar_lea.vmem [#allocation2], %s170
        %p172 = pneg %p58
        %p173 = pneg %p55
        %p174 = pneg %p84
        %p175 = pneg %p81
        %s176 = sand.u32 %s71, 1
        %s177 = scalar_lea.sflag [#allocation4], %s176
        %s178 = sand.u32 %s71, 1
        %s179 = smul.addr %s178, 64
        %s180 = scalar_lea.vmem [#allocation5], %s179
        %p181 = pneg %p110
        %p182 = pneg %p107
        %s183 = sand.u32 %s97, 1
        %s184 = scalar_lea.sflag [#allocation7], %s183
        %s185 = sand.u32 %s97, 1
        %s186 = smul.addr %s185, 64
        %s187 = scalar_lea.vmem [#allocation6], %s186
        %p188 = scmp.eq.s32.totalorder %s28, 0
        // Predicated region
        $region29: #{tpu_custom_call.1} parent=23 // pred_check
          %p189 = pneg %p188
        $region30: #{tpu_custom_call.1} parent=23 // pred_check_branch
          %191 = sbr.rel (%p189) target = $region32
        $region31: #{tpu_custom_call.1} parent=23 // pred_region
          %vm192 = vcmask 7168
          %193 = vst.msk [vmem:[%s180] sm:$0xff] %vm192, 0.0
          %194 = vst.msk [vmem:[%s180 + $0x8] sm:$0xff] %vm192, 0.0
          %195 = vst.msk [vmem:[%s180 + $0x10] sm:$0xff] %vm192, 0.0
          %196 = vst.msk [vmem:[%s180 + $0x18] sm:$0xff] %vm192, 0.0
          %197 = vst.msk [vmem:[%s180 + $0x20] sm:$0xff] %vm192, 0.0
          %198 = vst.msk [vmem:[%s180 + $0x28] sm:$0xff] %vm192, 0.0
          %199 = vst.msk [vmem:[%s180 + $0x30] sm:$0xff] %vm192, 0.0
          %200 = vst.msk [vmem:[%s180 + $0x38] sm:$0xff] %vm192, 0.0
          %201 = vst.msk [vmem:[%s187] sm:$0xff] %vm192, 0.0
          %202 = vst.msk [vmem:[%s187 + $0x8] sm:$0xff] %vm192, 0.0
          %203 = vst.msk [vmem:[%s187 + $0x10] sm:$0xff] %vm192, 0.0
          %204 = vst.msk [vmem:[%s187 + $0x18] sm:$0xff] %vm192, 0.0
          %205 = vst.msk [vmem:[%s187 + $0x20] sm:$0xff] %vm192, 0.0
          %206 = vst.msk [vmem:[%s187 + $0x28] sm:$0xff] %vm192, 0.0
          %207 = vst.msk [vmem:[%s187 + $0x30] sm:$0xff] %vm192, 0.0
          %208 = vst.msk [vmem:[%s187 + $0x38] sm:$0xff] %vm192, 0.0
        $region32: #{tpu_custom_call.1} parent=23 // pred_fallthru
          _
        %v209 = vld [vmem:[%s162] sm:$0xff]
        %v210 = vld [vmem:[%s162 + $0x8] sm:$0xff]
        %v211 = vld [vmem:[%s162 + $0x10] sm:$0xff]
        %v212 = vld [vmem:[%s162 + $0x18] sm:$0xff]
        %v213 = vld [vmem:[%s162 + $0x20] sm:$0xff]
        %v214 = vld [vmem:[%s162 + $0x28] sm:$0xff]
        %v215 = vld [vmem:[%s162 + $0x30] sm:$0xff]
        %v216 = vld [vmem:[%s162 + $0x38] sm:$0xff]
        %v217 = vld [vmem:[%s180] sm:$0xff]
        %v218 = vld [vmem:[%s180 + $0x8] sm:$0xff]
        %v219 = vld [vmem:[%s180 + $0x10] sm:$0xff]
        %v220 = vld [vmem:[%s180 + $0x18] sm:$0xff]
        %v221 = vld [vmem:[%s180 + $0x20] sm:$0xff]
        %v222 = vld [vmem:[%s180 + $0x28] sm:$0xff]
        %v223 = vld [vmem:[%s180 + $0x30] sm:$0xff]
        %v224 = vld [vmem:[%s180 + $0x38] sm:$0xff]
        %225 = vadd.xlane.f32.xlu0 %v209
        %v226 = vpop.xlane.xlu0 %225
        %227 = vadd.xlane.f32.xlu0 %v210
        %v228 = vpop.xlane.xlu0 %227
        %229 = vadd.xlane.f32.xlu0 %v211
        %v230 = vpop.xlane.xlu0 %229
        %231 = vadd.xlane.f32.xlu0 %v212
        %v232 = vpop.xlane.xlu0 %231
        %233 = vadd.xlane.f32.xlu0 %v213
        %v234 = vpop.xlane.xlu0 %233
        %235 = vadd.xlane.f32.xlu0 %v214
        %v236 = vpop.xlane.xlu0 %235
        %237 = vadd.xlane.f32.xlu0 %v215
        %v238 = vpop.xlane.xlu0 %237
        %239 = vadd.xlane.f32.xlu0 %v216
        %v240 = vpop.xlane.xlu0 %239
        %v241 = vadd.f32 %v217, %v226
        %v242 = vadd.f32 %v218, %v228
        %v243 = vadd.f32 %v219, %v230
        %v244 = vadd.f32 %v220, %v232
        %v245 = vadd.f32 %v221, %v234
        %v246 = vadd.f32 %v222, %v236
        %v247 = vadd.f32 %v223, %v238
        %v248 = vadd.f32 %v224, %v240
        %vm249 = vcmask 7168
        %250 = vst.msk [vmem:[%s180] sm:$0xff] %vm249, %v241
        %251 = vst.msk [vmem:[%s180 + $0x8] sm:$0xff] %vm249, %v242
        %252 = vst.msk [vmem:[%s180 + $0x10] sm:$0xff] %vm249, %v243
        %253 = vst.msk [vmem:[%s180 + $0x18] sm:$0xff] %vm249, %v244
        %254 = vst.msk [vmem:[%s180 + $0x20] sm:$0xff] %vm249, %v245
        %255 = vst.msk [vmem:[%s180 + $0x28] sm:$0xff] %vm249, %v246
        %256 = vst.msk [vmem:[%s180 + $0x30] sm:$0xff] %vm249, %v247
        %257 = vst.msk [vmem:[%s180 + $0x38] sm:$0xff] %vm249, %v248
        %v258 = vld [vmem:[%s187] sm:$0xff]
        %v259 = vld [vmem:[%s187 + $0x8] sm:$0xff]
        %v260 = vld [vmem:[%s187 + $0x10] sm:$0xff]
        %v261 = vld [vmem:[%s187 + $0x18] sm:$0xff]
        %v262 = vld [vmem:[%s187 + $0x20] sm:$0xff]
        %v263 = vld [vmem:[%s187 + $0x28] sm:$0xff]
        %v264 = vld [vmem:[%s187 + $0x30] sm:$0xff]
        %v265 = vld [vmem:[%s187 + $0x38] sm:$0xff]
        %v266 = vmul.f32 %v209, %v209
        %v267 = vmul.f32 %v210, %v210
        %v268 = vmul.f32 %v211, %v211
        %v269 = vmul.f32 %v212, %v212
        %v270 = vmul.f32 %v213, %v213
        %v271 = vmul.f32 %v214, %v214
        %v272 = vmul.f32 %v215, %v215
        %v273 = vmul.f32 %v216, %v216
        %274 = vadd.xlane.f32.xlu0 %v266
        %v275 = vpop.xlane.xlu0 %274
        %276 = vadd.xlane.f32.xlu0 %v267
        %v277 = vpop.xlane.xlu0 %276
        %278 = vadd.xlane.f32.xlu0 %v268
        %v279 = vpop.xlane.xlu0 %278
        %280 = vadd.xlane.f32.xlu0 %v269
        %v281 = vpop.xlane.xlu0 %280
        %282 = vadd.xlane.f32.xlu0 %v270
        %v283 = vpop.xlane.xlu0 %282
        %284 = vadd.xlane.f32.xlu0 %v271
        %v285 = vpop.xlane.xlu0 %284
        %286 = vadd.xlane.f32.xlu0 %v272
        %v287 = vpop.xlane.xlu0 %286
        %288 = vadd.xlane.f32.xlu0 %v273
        %v289 = vpop.xlane.xlu0 %288
        %v290 = vadd.f32 %v258, %v275
        %v291 = vadd.f32 %v259, %v277
        %v292 = vadd.f32 %v260, %v279
        %v293 = vadd.f32 %v261, %v281
        %v294 = vadd.f32 %v262, %v283
        %v295 = vadd.f32 %v263, %v285
        %v296 = vadd.f32 %v264, %v287
        %v297 = vadd.f32 %v265, %v289
        %298 = vst.msk [vmem:[%s187] sm:$0xff] %vm249, %v290
        %299 = vst.msk [vmem:[%s187 + $0x8] sm:$0xff] %vm249, %v291
        %300 = vst.msk [vmem:[%s187 + $0x10] sm:$0xff] %vm249, %v292
        %301 = vst.msk [vmem:[%s187 + $0x18] sm:$0xff] %vm249, %v293
        %302 = vst.msk [vmem:[%s187 + $0x20] sm:$0xff] %vm249, %v294
        %303 = vst.msk [vmem:[%s187 + $0x28] sm:$0xff] %vm249, %v295
        %304 = vst.msk [vmem:[%s187 + $0x30] sm:$0xff] %vm249, %v296
        %305 = vst.msk [vmem:[%s187 + $0x38] sm:$0xff] %vm249, %v297
        %s306 = sand.u32 %s71, 1
        %s307 = scalar_lea.sflag [#allocation4], %s306
        %s308 = sand.u32 %s71, 1
        %s309 = smul.addr %s308, 64
        %s310 = scalar_lea.vmem [#allocation5], %s309
        %s311 = sand.u32 %s97, 1
        %s312 = scalar_lea.sflag [#allocation7], %s311
        %s313 = sand.u32 %s97, 1
        %s314 = smul.addr %s313, 64
        %s315 = scalar_lea.vmem [#allocation6], %s314
        // Predicated region
        $region33: #{tpu_custom_call.1} parent=23 // pred_check
          %p316 = pneg %p81
        $region34: #{tpu_custom_call.1} parent=23 // pred_check_branch
          %318 = sbr.rel (%p316) target = $region36
        $region35: #{tpu_custom_call.1} parent=23 // pred_region
          %s320 = ssub.s32 1024, 1024
          %321 = vsyncadd %s307, %s320
          %s322 = smul.addr %s27, 8
          %s323 = smul.addr %s322, 128
          %s324 = scalar_lea.hbm %s1, %s323
          %s325 = sshll.u32 %s310, 4
          %s326 = int_to_ptr.vmem [resolvable:$true] %s325
          %331 = dma.vmem_to_hbm [thread:$0]  %s326, 1024, %s324, %s307, 128, 128, 8
        $region36: #{tpu_custom_call.1} parent=23 // pred_fallthru
          _
        // Predicated region
        $region37: #{tpu_custom_call.1} parent=23 // pred_check
          %p332 = pneg %p107
        $region38: #{tpu_custom_call.1} parent=23 // pred_check_branch
          %334 = sbr.rel (%p332) target = $region40
        $region39: #{tpu_custom_call.1} parent=23 // pred_region
          %s336 = ssub.s32 1024, 1024
          %337 = vsyncadd %s312, %s336
          %s338 = smul.addr %s27, 8
          %s339 = smul.addr %s338, 128
          %s340 = scalar_lea.hbm %s2, %s339
          %s341 = sshll.u32 %s315, 4
          %s342 = int_to_ptr.vmem [resolvable:$true] %s341
          %347 = dma.vmem_to_hbm [thread:$0]  %s342, 1024, %s340, %s312, 128, 128, 8
        $region40: #{tpu_custom_call.1} parent=23 // pred_fallthru
          _
      $region24: #{tpu_custom_call.1} parent=5 // pred_fallthru
        _
      %p348 = scmp.le.s32.totalorder 2, %s18
      // Predicated region
      $region41: #{tpu_custom_call.1} parent=5 // pred_check
        %p349 = pneg %p348
      $region42: #{tpu_custom_call.1} parent=5 // pred_check_branch
        %351 = sbr.rel (%p349) target = $region44
      $region43: #{tpu_custom_call.1} parent=5 // pred_region
        %s352 = ssub.s32 %s18, 2
        // Predicated region
        $region45: #{tpu_custom_call.1} parent=43 // pred_check
          %p353 = pneg %p87
        $region46: #{tpu_custom_call.1} parent=43 // pred_check_branch
          %355 = sbr.rel (%p353) target = $region48
        $region47: #{tpu_custom_call.1} parent=43 // pred_region
          %s356 = sand.u32 %s72, 1
          %s357 = scalar_lea.sflag [#allocation4], %s356
          %s358 = sand.u32 %s72, 1
          %s359 = smul.addr %s358, 64
          %s360 = scalar_lea.vmem [#allocation5], %s359
          %361 = dma.done %s357, 1024
        $region48: #{tpu_custom_call.1} parent=43 // pred_fallthru
          _
        // Predicated region
        $region49: #{tpu_custom_call.1} parent=43 // pred_check
          %p362 = pneg %p113
        $region50: #{tpu_custom_call.1} parent=43 // pred_check_branch
          %364 = sbr.rel (%p362) target = $region52
        $region51: #{tpu_custom_call.1} parent=43 // pred_region
          %s365 = sand.u32 %s98, 1
          %s366 = scalar_lea.sflag [#allocation7], %s365
          %s367 = sand.u32 %s98, 1
          %s368 = smul.addr %s367, 64
          %s369 = scalar_lea.vmem [#allocation6], %s368
          %370 = dma.done %s366, 1024
        $region52: #{tpu_custom_call.1} parent=43 // pred_fallthru
          _
      $region44: #{tpu_custom_call.1} parent=5 // pred_fallthru
        _
    $region6: #{tpu_custom_call.1} parent=1 // loop_footer
      %s22 = sadd.s32 1, %s18
    $region7: #{tpu_custom_call.1} parent=1 // loop_footer_branch
      %17 = sbr.rel target = $region3
    $region8: #{tpu_custom_call.1} parent=1 // loop_exit
      _
    %371 = vsyncpa [#allocation3], 1
    %s372 = scalar_lea.sflag [#allocation3], 1
    %373 = vsyncpa %s372, 1
    %374 = vsyncpa [#allocation4], 1
    %s375 = scalar_lea.sflag [#allocation4], 1
    %376 = vsyncpa %s375, 1
    %377 = vsyncpa [#allocation7], 1
    %s378 = scalar_lea.sflag [#allocation7], 1
    %379 = vsyncpa %s378, 1

</llo_original>
